<compile_context>
chip_gen: v7x
topology: tpu7x:2x2x1
jax: 0.10.0
libtpu: 0.0.40
codegen_flags: <defaults>
</compile_context>

<pallas_src>
import functools

import jax
import jax.numpy as jnp
from jax import lax
from jax.experimental import pallas as pl
from jax.experimental.pallas import tpu as pltpu


def _decoder_kernel(x_ref, m_ref, w_ref, o_ref, *, tl):
    """One (batch, L-tile) grid step.

    x_ref: (1, C, TL)            encoder output tile
    m_ref: (1, S, C, TL)         mask tile (all sources at once)
    w_ref: (NB, C, STRIDE)       transposed-conv filter split into NB bands
    o_ref: (1, S, T_OUT, STRIDE) output as (frame, intra-hop) view; resident
                                 across the L-tile axis and accumulated into.
    """
    l = pl.program_id(1)

    # Zero the resident output accumulator once, at the first L tile.
    @pl.when(l == 0)
    def _init():
        o_ref[...] = jnp.zeros_like(o_ref)

    n_bands = w_ref.shape[0]
    n_src = m_ref.shape[1]
    n_rows = tl + n_bands - 1          # output rows touched by this tile

    base = l * tl                      # first output row of this tile
    if tl % 8 == 0:
        base = pl.multiple_of(base, 8)   # sublane-aligned dynamic offset

    xv = x_ref[0]                      # (C, TL)
    for s in range(n_src):             # S (number of sources) is small: static unroll
        xm = xv * m_ref[0, s]          # (C, TL) masked encoding

        # Band-fold OLA: frames_b[t, j] = sum_c xm[c, t] * w[c, b*stride + j]
        # lands at output row t + b.  One MXU contraction over C per band;
        # accumulate the shifted bands in vregs, then do a single VMEM RMW.
        combined = None
        for b in range(n_bands):
            frames_b = lax.dot_general(
                xm, w_ref[b],
                dimension_numbers=(((0,), (0,)), ((), ())),
                preferred_element_type=jnp.float32)               # (TL, STRIDE)
            shifted = lax.pad(frames_b, jnp.float32(0.0),
                              ((b, n_bands - 1 - b, 0), (0, 0, 0)))  # (n_rows, STRIDE)
            combined = shifted if combined is None else combined + shifted

        # Accumulate into the resident VMEM output block (not a vreg accumulator).
        o_ref[0, s, pl.ds(base, n_rows), :] += combined.astype(o_ref.dtype)


def _choose_tile(L, C, S, stride, n_bands, itemsize, max_frames_per_tile,
                 vmem_budget_bytes=40 * 1024 * 1024):
    """Pick an L-tile (multiple of 128) so double-buffered inputs + resident
    output stay within a conservative VMEM budget on all TPU generations."""
    if L <= max_frames_per_tile:
        return L                                   # single tile: block == full dim
    out_bytes = S * (L + n_bands) * stride * 4     # resident output (f32)
    budget = max(vmem_budget_bytes - out_bytes, 4 * 1024 * 1024)
    # Per-tile streamed bytes: 2x double-buffer * (x block + masks block).
    per_frame = 2 * (S + 1) * C * itemsize
    tl = budget // max(per_frame, 1)
    tl = min(tl, max_frames_per_tile)
    tl = max(128, (tl // 128) * 128)               # multiple of 128 lanes
    return tl


def decoder_forward(x, masks, weight, stride, *, compute_dtype=None,
                    max_frames_per_tile=2048):
    """ConvTasNet Decoder forward.

    x:      (B, C, L)    encoder output
    masks:  (B, S, C, L) estimated masks
    weight: (C, K)       ConvTranspose1d weight[:, 0, :]  (module uses bias=False)
    Returns (B, S, (L-1)*stride + K) float32.
    """
    B, S, C, L = masks.shape
    assert x.shape == (B, C, L)
    assert weight.shape[0] == C
    K = weight.shape[1]
    assert stride >= 1
    out_len = (L - 1) * stride + K

    # Optional bf16 streaming of the large operands; accumulation stays f32 and
    # the returned waveform is explicitly f32.
    w = weight
    if compute_dtype is not None:
        x = x.astype(compute_dtype)
        masks = masks.astype(compute_dtype)
        w = w.astype(compute_dtype)

    # Band decomposition: pad K up to a multiple of stride with zero taps
    # (general-stride fallback; exact when stride == K // 2, the module default),
    # then split into NB bands of width `stride`.
    n_bands = -(-K // stride)
    k_pad = n_bands * stride
    if k_pad != K:
        w = jnp.pad(w, ((0, 0), (0, k_pad - K)))
    w_bands = jnp.transpose(w.reshape(C, n_bands, stride), (1, 0, 2))  # (NB, C, stride)

    # L tiling so double-buffered x/mask blocks fit VMEM on all generations.
    tl = _choose_tile(L, C, S, stride, n_bands, jnp.dtype(x.dtype).itemsize,
                      max_frames_per_tile)
    l_pad = -(-L // tl) * tl
    if l_pad != L:
        x = jnp.pad(x, ((0, 0), (0, 0), (0, l_pad - L)))
        masks = jnp.pad(masks, ((0, 0), (0, 0), (0, 0), (0, l_pad - L)))
    num_l = l_pad // tl

    # Output produced as a 2-D (frame, intra-hop) view: out2d[..., t, j] ==
    # waveform[..., t*stride + j]; row-major flatten of that view IS the
    # waveform, so the reshape below is free.
    # TODO(synk): for extremely long signals the full per-(b, s) output view is
    # kept resident in VMEM; chunk the output axis as well if that ever limits.
    t_out = l_pad + n_bands - 1

    kernel = functools.partial(_decoder_kernel, tl=tl)

    out2d = pl.pallas_call(
        kernel,
        out_shape=jax.ShapeDtypeStruct((B, S, t_out, stride), jnp.float32),
        grid=(B, num_l),
        in_specs=[
            pl.BlockSpec((1, C, tl), lambda b, l: (b, 0, l)),            # x
            pl.BlockSpec((1, S, C, tl), lambda b, l: (b, 0, 0, l)),      # masks (all S)
            pl.BlockSpec((n_bands, C, stride), lambda b, l: (0, 0, 0)),  # filter bands
        ],
        out_specs=pl.BlockSpec((1, S, t_out, stride), lambda b, l: (b, 0, 0, 0)),
        compiler_params=pltpu.CompilerParams(
            dimension_semantics=("parallel", "arbitrary"),
            vmem_limit_bytes=64 * 1024 * 1024),
    )(x, masks, w_bands)

    out = out2d.reshape(B, S, t_out * stride)[:, :, :out_len]
    return out


def _ref_decoder(x, masks, w, stride):
    """Plain-JAX reference (per-tap strided scatter-add)."""
    B, S, C, L = masks.shape
    K = w.shape[1]
    xm = x[:, None].astype(jnp.float32) * masks.astype(jnp.float32)
    frames = jnp.einsum("bscl,ck->bslk", xm, w.astype(jnp.float32))
    out_len = (L - 1) * stride + K
    out = jnp.zeros((B, S, out_len), jnp.float32)
    for k in range(K):
        out = out.at[:, :, k:k + (L - 1) * stride + 1:stride].add(frames[..., k])
    return out


if __name__ == "__main__":
    # --- small config consistent with the module defaults (stride = K // 2) ---
    B, S, C, L, K = 2, 2, 16, 8, 4
    stride = K // 2
    key = jax.random.PRNGKey(0)
    kx, km, kw = jax.random.split(key, 3)
    x = jax.random.normal(kx, (B, C, L), jnp.float32)
    masks = jax.random.uniform(km, (B, S, C, L), jnp.float32)
    bound = 1.0 / (C * K) ** 0.5
    weight = jax.random.uniform(kw, (C, K), jnp.float32, minval=-bound, maxval=bound)

    out = jax.block_until_ready(decoder_forward(x, masks, weight, stride))
    ref = _ref_decoder(x, masks, weight, stride)
    assert out.shape == (B, S, (L - 1) * stride + K)
    assert jnp.allclose(out, ref, atol=1e-5, rtol=1e-5), "f32 kernel/reference mismatch"

    # --- bf16 streaming path (memory-roofline optimization); loose tolerance ---
    out_bf16 = jax.block_until_ready(
        decoder_forward(x, masks, weight, stride, compute_dtype=jnp.bfloat16))
    assert jnp.allclose(out_bf16, ref, atol=5e-2, rtol=5e-2), "bf16 kernel mismatch"

    # --- multi-tile path (L > tile, L % tile != 0) to exercise seam accumulation ---
    B2, S2, C2, L2, K2 = 1, 2, 8, 300, 16
    stride2 = K2 // 2
    kx2, km2, kw2 = jax.random.split(jax.random.PRNGKey(1), 3)
    x2 = jax.random.normal(kx2, (B2, C2, L2), jnp.float32)
    m2 = jax.random.uniform(km2, (B2, S2, C2, L2), jnp.float32)
    w2 = jax.random.uniform(kw2, (C2, K2), jnp.float32, minval=-0.1, maxval=0.1)
    out2 = jax.block_until_ready(
        decoder_forward(x2, m2, w2, stride2, max_frames_per_tile=128))
    ref2 = _ref_decoder(x2, m2, w2, stride2)
    assert out2.shape == ref2.shape
    assert jnp.allclose(out2, ref2, atol=1e-4, rtol=1e-4), "tiled kernel mismatch"

    print("KERNEL_OK")
</pallas_src>

<mosaic_0001>
module attributes {stable_mosaic.version = 11 : i64} {
  func.func @_decoder_kernel(%arg0: i32, %arg1: i32, %arg2: memref<1x16x8xf32, #tpu.memory_space<vmem>>, %arg3: memref<1x2x16x8xf32, #tpu.memory_space<vmem>>, %arg4: memref<2x16x2xf32, #tpu.memory_space<vmem>>, %arg5: memref<1x2x9x2xf32, #tpu.memory_space<vmem>>) attributes {dimension_semantics = [#tpu.dimension_semantics<parallel>, #tpu.dimension_semantics<arbitrary>], iteration_bounds = array<i64: 2, 1>, scalar_prefetch = 0 : i64, scratch_operands = 0 : i64, tpu.core_type = #tpu.core_type<tc>, window_params = [{transform_indices = @transform_0, window_bounds = array<i64: 1, 16, 8>}, {transform_indices = @transform_1, window_bounds = array<i64: 1, 2, 16, 8>}, {pipeline_mode = #tpu.pipeline_mode<synchronous>, transform_indices = @transform_2, window_bounds = array<i64: 2, 16, 2>}, {transform_indices = @transform_3, window_bounds = array<i64: 1, 2, 9, 2>}]} {
    %c0_i32 = arith.constant 0 : i32
    %0 = arith.cmpi eq, %arg1, %c0_i32 : i32
    %1 = arith.extui %0 : i1 to i32
    %c0_i32_0 = arith.constant 0 : i32
    %2 = arith.cmpi ne, %1, %c0_i32_0 : i32
    scf.if %2 {
      %cst_41 = arith.constant 0.000000e+00 : f32
      %51 = vector.broadcast %cst_41 : f32 to vector<1x2x9x2xf32>
      %c0_42 = arith.constant 0 : index
      %c0_43 = arith.constant 0 : index
      %c0_44 = arith.constant 0 : index
      %c0_45 = arith.constant 0 : index
      %52 = vector.load %arg5[%c0_42, %c0_43, %c0_44, %c0_45] : memref<1x2x9x2xf32, #tpu.memory_space<vmem>>, vector<1x2x9x2xf32>
      tpu.vector_store %arg5[%c0_42, %c0_43, %c0_44, %c0_45], %51 {strides = array<i32>} : memref<1x2x9x2xf32, #tpu.memory_space<vmem>>, vector<1x2x9x2xf32>,
    } else {
    }
    %c8_i32 = arith.constant 8 : i32
    %3 = arith.muli %arg1, %c8_i32 : i32
    %4 = tpu.assume_multiple %3, 8 : i32
    %c0 = arith.constant 0 : index
    %c0_1 = arith.constant 0 : index
    %c0_2 = arith.constant 0 : index
    %5 = vector.load %arg2[%c0, %c0_1, %c0_2] : memref<1x16x8xf32, #tpu.memory_space<vmem>>, vector<1x16x8xf32>
    %6 = vector.shape_cast %5 : vector<1x16x8xf32> to vector<16x8xf32>
    %c0_3 = arith.constant 0 : index
    %c0_4 = arith.constant 0 : index
    %c0_5 = arith.constant 0 : index
    %c0_6 = arith.constant 0 : index
    %7 = vector.load %arg3[%c0_3, %c0_4, %c0_5, %c0_6] : memref<1x2x16x8xf32, #tpu.memory_space<vmem>>, vector<1x1x16x8xf32>
    %8 = vector.shape_cast %7 : vector<1x1x16x8xf32> to vector<16x8xf32>
    %9 = arith.mulf %6, %8 : vector<16x8xf32>
    %c0_7 = arith.constant 0 : index
    %c0_8 = arith.constant 0 : index
    %c0_9 = arith.constant 0 : index
    %10 = vector.load %arg4[%c0_7, %c0_8, %c0_9] : memref<2x16x2xf32, #tpu.memory_space<vmem>>, vector<1x16x2xf32>
    %11 = vector.shape_cast %10 : vector<1x16x2xf32> to vector<16x2xf32>
    %cst = arith.constant dense<0.000000e+00> : vector<8x2xf32>
    %12 = tpu.matmul %9, %11, %cst {dimension_numbers = #tpu.dot_dimension_numbers<[0], [0], [1], [1], [0, 1, 1, 1], [], []>} : vector<16x8xf32>, vector<16x2xf32>, vector<8x2xf32> -> vector<8x2xf32>
    %cst_10 = arith.constant 0.000000e+00 : f32
    %13 = vector.broadcast %cst_10 : f32 to vector<1x2xf32>
    %14 = tpu.concatenate %12, %13 in 0 : vector<8x2xf32>, vector<1x2xf32> -> vector<9x2xf32>
    %c1 = arith.constant 1 : index
    %c0_11 = arith.constant 0 : index
    %c0_12 = arith.constant 0 : index
    %15 = vector.load %arg4[%c1, %c0_11, %c0_12] : memref<2x16x2xf32, #tpu.memory_space<vmem>>, vector<1x16x2xf32>
    %16 = vector.shape_cast %15 : vector<1x16x2xf32> to vector<16x2xf32>
    %cst_13 = arith.constant dense<0.000000e+00> : vector<8x2xf32>
    %17 = tpu.matmul %9, %16, %cst_13 {dimension_numbers = #tpu.dot_dimension_numbers<[0], [0], [1], [1], [0, 1, 1, 1], [], []>} : vector<16x8xf32>, vector<16x2xf32>, vector<8x2xf32> -> vector<8x2xf32>
    %cst_14 = arith.constant 0.000000e+00 : f32
    %18 = vector.broadcast %cst_14 : f32 to vector<1x2xf32>
    %19 = tpu.concatenate %18, %17 in 0 : vector<1x2xf32>, vector<8x2xf32> -> vector<9x2xf32>
    %20 = arith.addf %14, %19 : vector<9x2xf32>
    %c0_15 = arith.constant 0 : index
    %c0_16 = arith.constant 0 : index
    %21 = arith.index_cast %4 : i32 to index
    %c0_17 = arith.constant 0 : index
    %22 = vector.load %arg5[%c0_15, %c0_16, %21, %c0_17] : memref<1x2x9x2xf32, #tpu.memory_space<vmem>>, vector<1x1x9x2xf32>
    %23 = vector.shape_cast %22 : vector<1x1x9x2xf32> to vector<9x2xf32>
    %24 = arith.addf %23, %20 : vector<9x2xf32>
    %c0_18 = arith.constant 0 : index
    %c0_19 = arith.constant 0 : index
    %25 = arith.index_cast %4 : i32 to index
    %c0_20 = arith.constant 0 : index
    %26 = vector.load %arg5[%c0_18, %c0_19, %25, %c0_20] : memref<1x2x9x2xf32, #tpu.memory_space<vmem>>, vector<1x1x9x2xf32>
    %27 = vector.shape_cast %26 : vector<1x1x9x2xf32> to vector<9x2xf32>
    %28 = vector.shape_cast %24 : vector<9x2xf32> to vector<1x1x9x2xf32>
    tpu.vector_store %arg5[%c0_18, %c0_19, %25, %c0_20], %28 {strides = array<i32>} : memref<1x2x9x2xf32, #tpu.memory_space<vmem>>, vector<1x1x9x2xf32>,
    %c0_21 = arith.constant 0 : index
    %c1_22 = arith.constant 1 : index
    %c0_23 = arith.constant 0 : index
    %c0_24 = arith.constant 0 : index
    %29 = vector.load %arg3[%c0_21, %c1_22, %c0_23, %c0_24] : memref<1x2x16x8xf32, #tpu.memory_space<vmem>>, vector<1x1x16x8xf32>
    %30 = vector.shape_cast %29 : vector<1x1x16x8xf32> to vector<16x8xf32>
    %31 = arith.mulf %6, %30 : vector<16x8xf32>
    %c0_25 = arith.constant 0 : index
    %c0_26 = arith.constant 0 : index
    %c0_27 = arith.constant 0 : index
    %32 = vector.load %arg4[%c0_25, %c0_26, %c0_27] : memref<2x16x2xf32, #tpu.memory_space<vmem>>, vector<1x16x2xf32>
    %33 = vector.shape_cast %32 : vector<1x16x2xf32> to vector<16x2xf32>
    %cst_28 = arith.constant dense<0.000000e+00> : vector<8x2xf32>
    %34 = tpu.matmul %31, %33, %cst_28 {dimension_numbers = #tpu.dot_dimension_numbers<[0], [0], [1], [1], [0, 1, 1, 1], [], []>} : vector<16x8xf32>, vector<16x2xf32>, vector<8x2xf32> -> vector<8x2xf32>
    %cst_29 = arith.constant 0.000000e+00 : f32
    %35 = vector.broadcast %cst_29 : f32 to vector<1x2xf32>
    %36 = tpu.concatenate %34, %35 in 0 : vector<8x2xf32>, vector<1x2xf32> -> vector<9x2xf32>
    %c1_30 = arith.constant 1 : index
    %c0_31 = arith.constant 0 : index
    %c0_32 = arith.constant 0 : index
    %37 = vector.load %arg4[%c1_30, %c0_31, %c0_32] : memref<2x16x2xf32, #tpu.memory_space<vmem>>, vector<1x16x2xf32>
    %38 = vector.shape_cast %37 : vector<1x16x2xf32> to vector<16x2xf32>
    %cst_33 = arith.constant dense<0.000000e+00> : vector<8x2xf32>
    %39 = tpu.matmul %31, %38, %cst_33 {dimension_numbers = #tpu.dot_dimension_numbers<[0], [0], [1], [1], [0, 1, 1, 1], [], []>} : vector<16x8xf32>, vector<16x2xf32>, vector<8x2xf32> -> vector<8x2xf32>
    %cst_34 = arith.constant 0.000000e+00 : f32
    %40 = vector.broadcast %cst_34 : f32 to vector<1x2xf32>
    %41 = tpu.concatenate %40, %39 in 0 : vector<1x2xf32>, vector<8x2xf32> -> vector<9x2xf32>
    %42 = arith.addf %36, %41 : vector<9x2xf32>
    %c0_35 = arith.constant 0 : index
    %c1_36 = arith.constant 1 : index
    %43 = arith.index_cast %4 : i32 to index
    %c0_37 = arith.constant 0 : index
    %44 = vector.load %arg5[%c0_35, %c1_36, %43, %c0_37] : memref<1x2x9x2xf32, #tpu.memory_space<vmem>>, vector<1x1x9x2xf32>
    %45 = vector.shape_cast %44 : vector<1x1x9x2xf32> to vector<9x2xf32>
    %46 = arith.addf %45, %42 : vector<9x2xf32>
    %c0_38 = arith.constant 0 : index
    %c1_39 = arith.constant 1 : index
    %47 = arith.index_cast %4 : i32 to index
    %c0_40 = arith.constant 0 : index
    %48 = vector.load %arg5[%c0_38, %c1_39, %47, %c0_40] : memref<1x2x9x2xf32, #tpu.memory_space<vmem>>, vector<1x1x9x2xf32>
    %49 = vector.shape_cast %48 : vector<1x1x9x2xf32> to vector<9x2xf32>
    %50 = vector.shape_cast %46 : vector<9x2xf32> to vector<1x1x9x2xf32>
    tpu.vector_store %arg5[%c0_38, %c1_39, %47, %c0_40], %50 {strides = array<i32>} : memref<1x2x9x2xf32, #tpu.memory_space<vmem>>, vector<1x1x9x2xf32>,
    return
  }
  func.func @transform_0(%arg0: i32, %arg1: i32) -> (i32, i32, i32) {
    %c0_i32 = arith.constant 0 : i32
    %c0_i32_0 = arith.constant 0 : i32
    return %arg0, %c0_i32, %arg1 : i32, i32, i32
  }
  func.func @transform_1(%arg0: i32, %arg1: i32) -> (i32, i32, i32, i32) {
    %c0_i32 = arith.constant 0 : i32
    %c0_i32_0 = arith.constant 0 : i32
    %c0_i32_1 = arith.constant 0 : i32
    return %arg0, %c0_i32, %c0_i32_0, %arg1 : i32, i32, i32, i32
  }
  func.func @transform_2(%arg0: i32, %arg1: i32) -> (i32, i32, i32) {
    %c0_i32 = arith.constant 0 : i32
    %c0_i32_0 = arith.constant 0 : i32
    %c0_i32_1 = arith.constant 0 : i32
    %c0_i32_2 = arith.constant 0 : i32
    return %c0_i32, %c0_i32_0, %c0_i32_1 : i32, i32, i32
  }
  func.func @transform_3(%arg0: i32, %arg1: i32) -> (i32, i32, i32, i32) {
    %c0_i32 = arith.constant 0 : i32
    %c0_i32_0 = arith.constant 0 : i32
    %c0_i32_1 = arith.constant 0 : i32
    %c0_i32_2 = arith.constant 0 : i32
    return %arg0, %c0_i32, %c0_i32_0, %c0_i32_1 : i32, i32, i32, i32
  }
}

</mosaic_0001>

<llo_original>
// kernel: tpu_custom_call.1
$region0: #{tpu_custom_call.1}
  #allocation0 [shape = 'u32[]', space=smem, size = 0x4, offset = 0x4, fixed_abs, tag = 'smem constant byte address 0x4 - core index']
  #allocation1 [shape = 'u32[144,128]{1,0:T(1,128)}', space=vmem, size = 0x12000, scoped, tag = 'internal scratch']
  %s0 = inlined_call_operand.hbm [shape: f32[2,16,8], index: 0, kind: input, shape index: {}]
  %s1 = inlined_call_operand.hbm [shape: f32[2,2,16,8], index: 1, kind: input, shape index: {}]
  %s2 = inlined_call_operand.hbm [shape: f32[2,16,2], index: 2, kind: input, shape index: {}]
  %s3 = inlined_call_operand.hbm [shape: f32[2,2,9,2], index: 3, kind: output, shape index: {}]
  %s4 = sld [smem:[#allocation0]]
  $region61: #{tpu_custom_call.1} parent=0
    _
  %s6 = ssub.s32 1, %s4
  %s7 = scalar_select 0, %s6, %s4
  $region1: #{tpu_custom_call.1} parent=0
    #allocation2 [shape = 'u8[16384]{0}', space=vmem, size = 0x4000, scoped, tag = 'input window, operand 0']
    #allocation3 [shape = 's32[2]{0}', space=sflag, size = 0x8, scoped, tag = 'scoped memory for tpu_custom_call.1']
    #allocation4 [shape = 's32[2]{0}', space=sflag, size = 0x8, scoped, tag = 'scoped memory for tpu_custom_call.1']
    #allocation5 [shape = 'u8[32768]{0}', space=vmem, size = 0x8000, scoped, tag = 'input window, operand 1']
    #allocation6 [shape = 's32[2]{0}', space=sflag, size = 0x8, scoped, tag = 'scoped memory for tpu_custom_call.1']
    #allocation7 [shape = 'u8[16384]{0}', space=vmem, size = 0x4000, scoped, tag = 'input window, operand 2, single buffered']
    #allocation8 [shape = 'u8[32768]{0}', space=vmem, size = 0x8000, scoped, tag = 'output window, operand 0']
    %8 = vsyncpa [#allocation3], 0
    %s9 = scalar_lea.sflag [#allocation3], 1
    %10 = vsyncpa %s9, 0
    %11 = vsyncpa [#allocation6], 0
    %s12 = scalar_lea.sflag [#allocation6], 1
    %13 = vsyncpa %s12, 0
    %14 = vsyncpa [#allocation4], 0
    %s15 = scalar_lea.sflag [#allocation4], 1
    %16 = vsyncpa %s15, 0
    loop: start=0, step=1, limit=4
    $region2: #{tpu_custom_call.1} parent=1 // loop_pre_header
      _
    $region3: #{tpu_custom_call.1} parent=1 // loop_header
      %s18 = sphi 0, %s22
      %p19 = scmp.ge.s32.totalorder %s18, 4
      %s25 = sphi 0, %s37
      %s26 = sphi 0, %s33
      %s27 = sphi 0, %s25
      %s28 = sphi 0, %s26
      %s29 = sphi 0, %s27
      %s30 = sphi 0, %s28
      %s42 = sphi 0, %s44
      %s45 = sphi 0, %s42
      %s46 = sphi 0, %s45
      %s62 = sphi 0, %s46
      %s70 = sphi 0, %s72
      %s73 = sphi 0, %s70
      %s74 = sphi 0, %s73
      %s90 = sphi 0, %s74
      %s94 = sphi 0, %s94
      %s96 = sphi 0, %s94
      %s97 = sphi 0, %s96
      %s111 = sphi 0, %s97
      %s117 = sphi 0, %s119
      %s120 = sphi 0, %s117
      %s121 = sphi 0, %s120
      %s137 = sphi 0, %s121
    $region4: #{tpu_custom_call.1} parent=1 // loop_header_branch
      %21 = sbr.rel (%p19) target = $region8
    $region5: #{tpu_custom_call.1} parent=1 // loop_body
      %s23 = ssub.s32 %s18, 1
      %s24 = ssub.s32 %s18, 2
      %s31 = sadd.s32 1, %s26
      %p32 = scmp.ge.s32.totalorder %s31, 1
      %s33 = scalar_select %p32, 0, %s31
      %s34 = sadd.s32 1, %s25
      %s35 = scalar_select %p32, %s34, %s25
      %p36 = scmp.ge.s32.totalorder %s35, 2
      %s37 = scalar_select %p36, 0, %s35
      %s38 = ssub.s32 %s25, %s37
      %s39 = ssub.s32 %s26, %s33
      %s40 = sor.u32 %s38, %s39
      %p41 = scmp.eq.s32.totalorder %s40, 0
      %s43 = sadd.s32 %s42, 1
      %s44 = scalar_select %p41, %s42, %s43
      %p47 = pneg %p41
      %p48 = scmp.eq.s32.totalorder %s18, 1
      %p49 = por %p47, %p48
      %p50 = scmp.ne.s32.totalorder %s42, %s45
      %p51 = scmp.eq.s32.totalorder %s18, 0
      %p52 = por %p50, %p51
      %p53 = scmp.ne.s32.totalorder %s42, %s45
      %p54 = scmp.eq.s32.totalorder %s23, 1
      %p55 = por %p53, %p54
      %p56 = scmp.ne.s32.totalorder %s45, %s46
      %p57 = scmp.eq.s32.totalorder %s23, 0
      %p58 = por %p56, %p57
      %p59 = scmp.ne.s32.totalorder %s45, %s46
      %p60 = scmp.eq.s32.totalorder %s24, 1
      %p61 = por %p59, %p60
      %p63 = scmp.ne.s32.totalorder %s46, %s62
      %p64 = scmp.eq.s32.totalorder %s24, 0
      %p65 = por %p63, %p64
      %s66 = ssub.s32 %s25, %s37
      %s67 = ssub.s32 %s26, %s33
      %s68 = sor.u32 %s66, %s67
      %p69 = scmp.eq.s32.totalorder %s68, 0
      %s71 = sadd.s32 %s70, 1
      %s72 = scalar_select %p69, %s70, %s71
      %p75 = pneg %p69
      %p76 = scmp.eq.s32.totalorder %s18, 1
      %p77 = por %p75, %p76
      %p78 = scmp.ne.s32.totalorder %s70, %s73
      %p79 = scmp.eq.s32.totalorder %s18, 0
      %p80 = por %p78, %p79
      %p81 = scmp.ne.s32.totalorder %s70, %s73
      %p82 = scmp.eq.s32.totalorder %s23, 1
      %p83 = por %p81, %p82
      %p84 = scmp.ne.s32.totalorder %s73, %s74
      %p85 = scmp.eq.s32.totalorder %s23, 0
      %p86 = por %p84, %p85
      %p87 = scmp.ne.s32.totalorder %s73, %s74
      %p88 = scmp.eq.s32.totalorder %s24, 1
      %p89 = por %p87, %p88
      %p91 = scmp.ne.s32.totalorder %s74, %s90
      %p92 = scmp.eq.s32.totalorder %s24, 0
      %p93 = por %p91, %p92
      %s95 = sadd.s32 %s94, 1
      %p98 = scmp.eq.s32.totalorder %s18, 1
      %p99 = scmp.ne.s32.totalorder %s94, %s96
      %p100 = scmp.eq.s32.totalorder %s18, 0
      %p101 = por %p99, %p100
      %p102 = scmp.ne.s32.totalorder %s94, %s96
      %p103 = scmp.eq.s32.totalorder %s23, 1
      %p104 = por %p102, %p103
      %p105 = scmp.ne.s32.totalorder %s96, %s97
      %p106 = scmp.eq.s32.totalorder %s23, 0
      %p107 = por %p105, %p106
      %p108 = scmp.ne.s32.totalorder %s96, %s97
      %p109 = scmp.eq.s32.totalorder %s24, 1
      %p110 = por %p108, %p109
      %p112 = scmp.ne.s32.totalorder %s97, %s111
      %p113 = scmp.eq.s32.totalorder %s24, 0
      %p114 = por %p112, %p113
      %s115 = ssub.s32 %s25, %s37
      %p116 = scmp.eq.s32.totalorder %s115, 0
      %s118 = sadd.s32 %s117, 1
      %s119 = scalar_select %p116, %s117, %s118
      %p122 = pneg %p116
      %p123 = scmp.eq.s32.totalorder %s18, 1
      %p124 = por %p122, %p123
      %p125 = scmp.ne.s32.totalorder %s117, %s120
      %p126 = scmp.eq.s32.totalorder %s18, 0
      %p127 = por %p125, %p126
      %p128 = scmp.ne.s32.totalorder %s117, %s120
      %p129 = scmp.eq.s32.totalorder %s23, 1
      %p130 = por %p128, %p129
      %p131 = scmp.ne.s32.totalorder %s120, %s121
      %p132 = scmp.eq.s32.totalorder %s23, 0
      %p133 = por %p131, %p132
      %p134 = scmp.ne.s32.totalorder %s120, %s121
      %p135 = scmp.eq.s32.totalorder %s24, 1
      %p136 = por %p134, %p135
      %p138 = scmp.ne.s32.totalorder %s121, %s137
      %p139 = scmp.eq.s32.totalorder %s24, 0
      %p140 = por %p138, %p139
      %p141 = scmp.le.s32.totalorder 1, %s18
      %p142 = scmp.lt.s32.totalorder %s18, 3
      %p143 = pnand %p141, %p142
      %p144 = pneg %p143
      // Predicated region
      $region9: #{tpu_custom_call.1} parent=5 // pred_check
        _
      $region10: #{tpu_custom_call.1} parent=5 // pred_check_branch
        %146 = sbr.rel (%p143) target = $region12
      $region11: #{tpu_custom_call.1} parent=5 // pred_region
        %s147 = ssub.s32 %s18, 1
        // Predicated region
        $region13: #{tpu_custom_call.1} parent=11 // pred_check
          %p148 = pneg %p107
        $region14: #{tpu_custom_call.1} parent=11 // pred_check_branch
          %150 = sbr.rel (%p148) target = $region16
        $region15: #{tpu_custom_call.1} parent=11 // pred_region
          %s152 = ssub.s32 512, 512
          %153 = vsyncadd [#allocation6], %s152
          %s154 = sshll.u32 [#allocation7], 4
          %s155 = int_to_ptr.vmem [resolvable:$true] %s154
          %160 = dma.hbm_to_vmem [thread:$0]  %s2, 512, %s155, [#allocation6], 128, 128, 8
        $region16: #{tpu_custom_call.1} parent=11 // pred_fallthru
          _
      $region12: #{tpu_custom_call.1} parent=5 // pred_fallthru
        _
      %p161 = scmp.lt.s32.totalorder %s18, 2
      // Predicated region
      $region17: #{tpu_custom_call.1} parent=5 // pred_check
        %p162 = pneg %p161
      $region18: #{tpu_custom_call.1} parent=5 // pred_check_branch
        %164 = sbr.rel (%p162) target = $region20
      $region19: #{tpu_custom_call.1} parent=5 // pred_region
        // Predicated region
        $region21: #{tpu_custom_call.1} parent=19 // pred_check
          %p165 = pneg %p52
        $region22: #{tpu_custom_call.1} parent=19 // pred_check_branch
          %167 = sbr.rel (%p165) target = $region24
        $region23: #{tpu_custom_call.1} parent=19 // pred_region
          %s168 = sand.u32 %s42, 1
          %s169 = scalar_lea.sflag [#allocation3], %s168
          %s170 = sand.u32 %s42, 1
          %s171 = smul.addr %s170, 16
          %s172 = scalar_lea.vmem [#allocation2], %s171
          %s174 = ssub.s32 256, 256
          %175 = vsyncadd %s169, %s174
          %s176 = smul.addr %s25, 2
          %s177 = sadd.s32 %s26, %s176
          %s178 = smul.addr %s177, 128
          %s179 = scalar_lea.hbm %s0, %s178
          %s180 = sshll.u32 %s172, 4
          %s181 = int_to_ptr.vmem [resolvable:$true] %s180
          %186 = dma.hbm_to_vmem [thread:$0]  %s179, 256, %s181, %s169, 128, 128, 8
        $region24: #{tpu_custom_call.1} parent=19 // pred_fallthru
          _
        // Predicated region
        $region25: #{tpu_custom_call.1} parent=19 // pred_check
          %p187 = pneg %p80
        $region26: #{tpu_custom_call.1} parent=19 // pred_check_branch
          %189 = sbr.rel (%p187) target = $region28
        $region27: #{tpu_custom_call.1} parent=19 // pred_region
          %s190 = sand.u32 %s18, 1
          %s191 = scalar_lea.sflag [#allocation6], %s190
          %s192 = sand.u32 %s70, 1
          %s193 = smul.addr %s192, 32
          %s194 = scalar_lea.vmem [#allocation5], %s193
          %s196 = ssub.s32 512, 512
          %197 = vsyncadd %s191, %s196
          %s198 = smul.addr %s25, 4
          %s199 = sadd.s32 %s26, %s198
          %s200 = smul.addr %s199, 128
          %s201 = scalar_lea.hbm %s1, %s200
          %s202 = sshll.u32 %s194, 4
          %s203 = int_to_ptr.vmem [resolvable:$true] %s202
          %208 = dma.hbm_to_vmem [thread:$0]  %s201, 512, %s203, %s191, 128, 128, 8
        $region28: #{tpu_custom_call.1} parent=19 // pred_fallthru
          _
      $region20: #{tpu_custom_call.1} parent=5 // pred_fallthru
        _
      %p209 = scmp.le.s32.totalorder 1, %s18
      %p210 = scmp.lt.s32.totalorder %s18, 3
      %p211 = pnand %p209, %p210
      %p212 = pneg %p211
      // Predicated region
      $region29: #{tpu_custom_call.1} parent=5 // pred_check
        _
      $region30: #{tpu_custom_call.1} parent=5 // pred_check_branch
        %214 = sbr.rel (%p211) target = $region32
      $region31: #{tpu_custom_call.1} parent=5 // pred_region
        %s215 = ssub.s32 %s18, 1
        %s216 = sand.u32 %s45, 1
        %s217 = scalar_lea.sflag [#allocation3], %s216
        %s218 = sand.u32 %s45, 1
        %s219 = smul.addr %s218, 16
        %s220 = scalar_lea.vmem [#allocation2], %s219
        // Predicated region
        $region33: #{tpu_custom_call.1} parent=31 // pred_check
          %p221 = pneg %p58
        $region34: #{tpu_custom_call.1} parent=31 // pred_check_branch
          %223 = sbr.rel (%p221) target = $region36
        $region35: #{tpu_custom_call.1} parent=31 // pred_region
          %224 = dma.done %s217, 256
        $region36: #{tpu_custom_call.1} parent=31 // pred_fallthru
          _
        %s225 = sand.u32 %s23, 1
        %s226 = scalar_lea.sflag [#allocation6], %s225
        %s227 = sand.u32 %s73, 1
        %s228 = smul.addr %s227, 32
        %s229 = scalar_lea.vmem [#allocation5], %s228
        // Predicated region
        $region37: #{tpu_custom_call.1} parent=31 // pred_check
          %p230 = pneg %p86
        $region38: #{tpu_custom_call.1} parent=31 // pred_check_branch
          %232 = sbr.rel (%p230) target = $region40
        $region39: #{tpu_custom_call.1} parent=31 // pred_region
          %233 = dma.done %s226, 512
        $region40: #{tpu_custom_call.1} parent=31 // pred_fallthru
          _
        // Predicated region
        $region41: #{tpu_custom_call.1} parent=31 // pred_check
          %p234 = pneg %p107
        $region42: #{tpu_custom_call.1} parent=31 // pred_check_branch
          %236 = sbr.rel (%p234) target = $region44
        $region43: #{tpu_custom_call.1} parent=31 // pred_region
          %237 = dma.done [#allocation6], 512
        $region44: #{tpu_custom_call.1} parent=31 // pred_fallthru
          _
        %s238 = sand.u32 %s45, 1
        %s239 = scalar_lea.sflag [#allocation3], %s238
        %s240 = sand.u32 %s45, 1
        %s241 = smul.addr %s240, 16
        %s242 = scalar_lea.vmem [#allocation2], %s241
        %p243 = pneg %p58
        %p244 = pneg %p55
        %s245 = sand.u32 %s23, 1
        %s246 = scalar_lea.sflag [#allocation6], %s245
        %s247 = sand.u32 %s73, 1
        %s248 = smul.addr %s247, 32
        %s249 = scalar_lea.vmem [#allocation5], %s248
        %p250 = pneg %p86
        %p251 = pneg %p83
        %p252 = pneg %p107
        %p253 = pneg %p104
        %p254 = pneg %p133
        %p255 = pneg %p130
        %s256 = sand.u32 %s120, 1
        %s257 = scalar_lea.sflag [#allocation4], %s256
        %s258 = sand.u32 %s120, 1
        %s259 = smul.addr %s258, 32
        %s260 = scalar_lea.vmem [#allocation8], %s259
        %p261 = scmp.eq.s32.totalorder %s28, 0
        // Predicated region
        $region45: #{tpu_custom_call.1} parent=31 // pred_check
          %p262 = pneg %p261
        $region46: #{tpu_custom_call.1} parent=31 // pred_check_branch
          %264 = sbr.rel (%p262) target = $region48
        $region47: #{tpu_custom_call.1} parent=31 // pred_region
          %vm265 = vcmask 15360
          %266 = vst.msk [vmem:[%s260] sm:$0xff] %vm265, 0.0
          %vm267 = vcmask 8192
          %268 = vst.msk [vmem:[%s260 + $0x8] sm:$0x1] %vm267, 0.0
          %269 = vst.msk [vmem:[%s260 + $0x10] sm:$0xff] %vm265, 0.0
          %270 = vst.msk [vmem:[%s260 + $0x18] sm:$0x1] %vm267, 0.0
        $region48: #{tpu_custom_call.1} parent=31 // pred_fallthru
          _
        %s271 = smul.u32 %s28, 8
        %v272 = vld [vmem:[%s220] sm:$0xff]
        %v273 = vld [vmem:[%s220 + $0x8] sm:$0xff]
        %v274 = vld [vmem:[%s229] sm:$0xff]
        %v275 = vld [vmem:[%s229 + $0x8] sm:$0xff]
        %v276 = vmul.f32 %v272, %v274
        %v277 = vmul.f32 %v273, %v275
        %v278 = vld [vmem:[#allocation7] sm:$0xff]
        %v279 = vld [vmem:[#allocation7 + $0x8] sm:$0xff]
        %280 = vxpose.xlu0.b32.start [1/16] %v276, 128
        %281 = vxpose.xlu0.b32.cont [2/16] %v277, 128
        %282 = vxpose.xlu0.b32.cont [3/16] 0.0, 128
        %283 = vxpose.xlu0.b32.cont [4/16] 0.0, 128
        %284 = vxpose.xlu0.b32.cont [5/16] 0.0, 128
        %285 = vxpose.xlu0.b32.cont [6/16] 0.0, 128
        %286 = vxpose.xlu0.b32.cont [7/16] 0.0, 128
        %287 = vxpose.xlu0.b32.cont [8/16] 0.0, 128
        %288 = vxpose.xlu0.b32.cont [9/16] 0.0, 128
        %289 = vxpose.xlu0.b32.cont [10/16] 0.0, 128
        %290 = vxpose.xlu0.b32.cont [11/16] 0.0, 128
        %291 = vxpose.xlu0.b32.cont [12/16] 0.0, 128
        %292 = vxpose.xlu0.b32.cont [13/16] 0.0, 128
        %293 = vxpose.xlu0.b32.cont [14/16] 0.0, 128
        %294 = vxpose.xlu0.b32.cont [15/16] 0.0, 128
        %295 = vxpose.xlu0.b32.end [16/16] 0.0, 128
        %v296 = vpop.trf.xlu0
        %v297 = vpop.trf.xlu0
        %v298 = vpop.trf.xlu0
        %v299 = vpop.trf.xlu0
        %v300 = vpop.trf.xlu0
        %v301 = vpop.trf.xlu0
        %v302 = vpop.trf.xlu0
        %v303 = vpop.trf.xlu0
        %v304 = vpop.trf.xlu0
        %v305 = vpop.trf.xlu0
        %v306 = vpop.trf.xlu0
        %v307 = vpop.trf.xlu0
        %v308 = vpop.trf.xlu0
        %v309 = vpop.trf.xlu0
        %v310 = vpop.trf.xlu0
        %v311 = vpop.trf.xlu0
        %vm312 = vcmask 130048
        %v314 = vsel %vm312, %v296, 0
        %316 = vmatprep.subr.mxu0 0.0
        %317 = vmatpush1.msra.mxu0 %v278
        %318 = vmatprep.subr.mxu0 0.0
        %319 = vmatpush1.msra.mxu0 %v279
        %320 = vmatprep.subr.mxu0 0.0
        %321 = vmatpush1.msra.mxu0 0.0
        %322 = vmatprep.subr.mxu0 0.0
        %323 = vmatpush1.msra.mxu0 0.0
        %324 = vmatprep.subr.mxu0 0.0
        %325 = vmatpush1.msra.mxu0 0.0
        %326 = vmatprep.subr.mxu0 0.0
        %327 = vmatpush1.msra.mxu0 0.0
        %328 = vmatprep.subr.mxu0 0.0
        %329 = vmatpush1.msra.mxu0 0.0
        %330 = vmatprep.subr.mxu0 0.0
        %331 = vmatpush1.msra.mxu0 0.0
        %332 = vmatprep.subr.mxu0 0.0
        %333 = vmatpush1.msra.mxu0 0.0
        %334 = vmatprep.subr.mxu0 0.0
        %335 = vmatpush1.msra.mxu0 0.0
        %336 = vmatprep.subr.mxu0 0.0
        %337 = vmatpush1.msra.mxu0 0.0
        %338 = vmatprep.subr.mxu0 0.0
        %339 = vmatpush1.msra.mxu0 0.0
        %340 = vmatprep.subr.mxu0 0.0
        %341 = vmatpush1.msra.mxu0 0.0
        %342 = vmatprep.subr.mxu0 0.0
        %343 = vmatpush1.msra.mxu0 0.0
        %344 = vmatprep.subr.mxu0 0.0
        %345 = vmatpush1.msra.mxu0 0.0
        %346 = vmatprep.subr.mxu0 0.0
        %347 = vmatpush1.msra.mxu0 0.0
        %348 = vmatprep.subr.mxu0 0.0
        %349 = vmatpush1.msra.mxu0 0.0
        %350 = vmatprep.subr.mxu0 0.0
        %351 = vmatpush1.msra.mxu0 0.0
        %352 = vmatprep.subr.mxu0 0.0
        %353 = vmatpush1.msra.mxu0 0.0
        %354 = vmatprep.subr.mxu0 0.0
        %355 = vmatpush1.msra.mxu0 0.0
        %356 = vmatprep.subr.mxu0 0.0
        %357 = vmatpush1.msra.mxu0 0.0
        %358 = vmatprep.subr.mxu0 0.0
        %359 = vmatpush1.msra.mxu0 0.0
        %360 = vmatprep.subr.mxu0 0.0
        %361 = vmatpush1.msra.mxu0 0.0
        %362 = vmatprep.subr.mxu0 0.0
        %363 = vmatpush1.msra.mxu0 0.0
        %364 = vmatprep.subr.mxu0 0.0
        %365 = vmatpush1.msra.mxu0 0.0
        %366 = vmatprep.subr.mxu0 0.0
        %367 = vmatpush1.msra.mxu0 0.0
        %368 = vmatprep.subr.mxu0 0.0
        %369 = vmatpush1.msra.mxu0 0.0
        %370 = vmatprep.subr.mxu0 0.0
        %371 = vmatpush1.msra.mxu0 0.0
        %372 = vmatprep.subr.mxu0 0.0
        %373 = vmatpush1.msra.mxu0 0.0
        %374 = vmatprep.subr.mxu0 0.0
        %375 = vmatpush1.msra.mxu0 0.0
        %376 = vmatprep.subr.mxu0 0.0
        %377 = vmatpush1.msra.mxu0 0.0
        %378 = vmatprep.subr.mxu0 0.0
        %379 = vmatpush1.msra.mxu0 0.0
        %380 = vmatprep.mubr.f32.mxu0 0.0
        %381 = vmatmul.mubr.f32.gmra.mrb[0].mxu0 %v314
        %v382 = vpop.f32.mrb[0].mxu0
        %v383 = vadd.f32 0.0, %v382
        %v384 = vpop.f32.mrb[0].mxu0
        %385 = vdwg.mxu0
        %s386 = scalar_lea.vmem [#allocation7], 16
        %v387 = vld [vmem:[%s386] sm:$0xff]
        %v388 = vld [vmem:[%s386 + $0x8] sm:$0xff]
        %389 = vmatprep.subr.mxu0 0.0
        %390 = vmatpush1.msra.mxu0 %v387
        %391 = vmatprep.subr.mxu0 0.0
        %392 = vmatpush1.msra.mxu0 %v388
        %393 = vmatprep.subr.mxu0 0.0
        %394 = vmatpush1.msra.mxu0 0.0
        %395 = vmatprep.subr.mxu0 0.0
        %396 = vmatpush1.msra.mxu0 0.0
        %397 = vmatprep.subr.mxu0 0.0
        %398 = vmatpush1.msra.mxu0 0.0
        %399 = vmatprep.subr.mxu0 0.0
        %400 = vmatpush1.msra.mxu0 0.0
        %401 = vmatprep.subr.mxu0 0.0
        %402 = vmatpush1.msra.mxu0 0.0
        %403 = vmatprep.subr.mxu0 0.0
        %404 = vmatpush1.msra.mxu0 0.0
        %405 = vmatprep.subr.mxu0 0.0
        %406 = vmatpush1.msra.mxu0 0.0
        %407 = vmatprep.subr.mxu0 0.0
        %408 = vmatpush1.msra.mxu0 0.0
        %409 = vmatprep.subr.mxu0 0.0
        %410 = vmatpush1.msra.mxu0 0.0
        %411 = vmatprep.subr.mxu0 0.0
        %412 = vmatpush1.msra.mxu0 0.0
        %413 = vmatprep.subr.mxu0 0.0
        %414 = vmatpush1.msra.mxu0 0.0
        %415 = vmatprep.subr.mxu0 0.0
        %416 = vmatpush1.msra.mxu0 0.0
        %417 = vmatprep.subr.mxu0 0.0
        %418 = vmatpush1.msra.mxu0 0.0
        %419 = vmatprep.subr.mxu0 0.0
        %420 = vmatpush1.msra.mxu0 0.0
        %421 = vmatprep.subr.mxu0 0.0
        %422 = vmatpush1.msra.mxu0 0.0
        %423 = vmatprep.subr.mxu0 0.0
        %424 = vmatpush1.msra.mxu0 0.0
        %425 = vmatprep.subr.mxu0 0.0
        %426 = vmatpush1.msra.mxu0 0.0
        %427 = vmatprep.subr.mxu0 0.0
        %428 = vmatpush1.msra.mxu0 0.0
        %429 = vmatprep.subr.mxu0 0.0
        %430 = vmatpush1.msra.mxu0 0.0
        %431 = vmatprep.subr.mxu0 0.0
        %432 = vmatpush1.msra.mxu0 0.0
        %433 = vmatprep.subr.mxu0 0.0
        %434 = vmatpush1.msra.mxu0 0.0
        %435 = vmatprep.subr.mxu0 0.0
        %436 = vmatpush1.msra.mxu0 0.0
        %437 = vmatprep.subr.mxu0 0.0
        %438 = vmatpush1.msra.mxu0 0.0
        %439 = vmatprep.subr.mxu0 0.0
        %440 = vmatpush1.msra.mxu0 0.0
        %441 = vmatprep.subr.mxu0 0.0
        %442 = vmatpush1.msra.mxu0 0.0
        %443 = vmatprep.subr.mxu0 0.0
        %444 = vmatpush1.msra.mxu0 0.0
        %445 = vmatprep.subr.mxu0 0.0
        %446 = vmatpush1.msra.mxu0 0.0
        %447 = vmatprep.subr.mxu0 0.0
        %448 = vmatpush1.msra.mxu0 0.0
        %449 = vmatprep.subr.mxu0 0.0
        %450 = vmatpush1.msra.mxu0 0.0
        %451 = vmatprep.subr.mxu0 0.0
        %452 = vmatpush1.msra.mxu0 0.0
        %453 = vmatprep.mubr.f32.mxu0 0.0
        %454 = vmatmul.mubr.f32.gmra.mrb[0].mxu0 %v314
        %v455 = vpop.f32.mrb[0].mxu0
        %v456 = vadd.f32 0.0, %v455
        %v457 = vpop.f32.mrb[0].mxu0
        %458 = vdwg.mxu0
        %v460 = vrot.slane %v456, 7
        %vm462 = vcmask 1040384
        %v463 = vsel %vm462, 0.0, %v460
        %v464 = vadd.f32 %v383, %v463
        %v465 = vadd.f32 %v460, 0.0
        %s466 = scalar_lea.vmem %s260, %s271 [#allocation8]
        %v467 = vld [vmem:[%s466] sm:$0xff]
        %v468 = vld [vmem:[%s466 + $0x8] sm:$0x1]
        %v469 = vadd.f32 %v467, %v464
        %v470 = vadd.f32 %v468, %v465
        %vm471 = vcmask 15360
        %472 = vst.msk [vmem:[%s466] sm:$0xff] %vm471, %v469
        %vm473 = vcmask 8192
        %474 = vst.msk [vmem:[%s466 + $0x8] sm:$0x1] %vm473, %v470
        %s475 = scalar_lea.vmem %s229, 16 [#allocation5]
        %v476 = vld [vmem:[%s475] sm:$0xff]
        %v477 = vld [vmem:[%s475 + $0x8] sm:$0xff]
        %v478 = vmul.f32 %v272, %v476
        %v479 = vmul.f32 %v273, %v477
        %v480 = vld [vmem:[#allocation7] sm:$0xff]
        %v481 = vld [vmem:[#allocation7 + $0x8] sm:$0xff]
        %482 = vxpose.xlu0.b32.start [1/16] %v478, 128
        %483 = vxpose.xlu0.b32.cont [2/16] %v479, 128
        %484 = vxpose.xlu0.b32.cont [3/16] 0.0, 128
        %485 = vxpose.xlu0.b32.cont [4/16] 0.0, 128
        %486 = vxpose.xlu0.b32.cont [5/16] 0.0, 128
        %487 = vxpose.xlu0.b32.cont [6/16] 0.0, 128
        %488 = vxpose.xlu0.b32.cont [7/16] 0.0, 128
        %489 = vxpose.xlu0.b32.cont [8/16] 0.0, 128
        %490 = vxpose.xlu0.b32.cont [9/16] 0.0, 128
        %491 = vxpose.xlu0.b32.cont [10/16] 0.0, 128
        %492 = vxpose.xlu0.b32.cont [11/16] 0.0, 128
        %493 = vxpose.xlu0.b32.cont [12/16] 0.0, 128
        %494 = vxpose.xlu0.b32.cont [13/16] 0.0, 128
        %495 = vxpose.xlu0.b32.cont [14/16] 0.0, 128
        %496 = vxpose.xlu0.b32.cont [15/16] 0.0, 128
        %497 = vxpose.xlu0.b32.end [16/16] 0.0, 128
        %v498 = vpop.trf.xlu0
        %v499 = vpop.trf.xlu0
        %v500 = vpop.trf.xlu0
        %v501 = vpop.trf.xlu0
        %v502 = vpop.trf.xlu0
        %v503 = vpop.trf.xlu0
        %v504 = vpop.trf.xlu0
        %v505 = vpop.trf.xlu0
        %v506 = vpop.trf.xlu0
        %v507 = vpop.trf.xlu0
        %v508 = vpop.trf.xlu0
        %v509 = vpop.trf.xlu0
        %v510 = vpop.trf.xlu0
        %v511 = vpop.trf.xlu0
        %v512 = vpop.trf.xlu0
        %v513 = vpop.trf.xlu0
        %v515 = vsel %vm312, %v498, 0
        %517 = vmatprep.subr.mxu0 0.0
        %518 = vmatpush1.msra.mxu0 %v480
        %519 = vmatprep.subr.mxu0 0.0
        %520 = vmatpush1.msra.mxu0 %v481
        %521 = vmatprep.subr.mxu0 0.0
        %522 = vmatpush1.msra.mxu0 0.0
        %523 = vmatprep.subr.mxu0 0.0
        %524 = vmatpush1.msra.mxu0 0.0
        %525 = vmatprep.subr.mxu0 0.0
        %526 = vmatpush1.msra.mxu0 0.0
        %527 = vmatprep.subr.mxu0 0.0
        %528 = vmatpush1.msra.mxu0 0.0
        %529 = vmatprep.subr.mxu0 0.0
        %530 = vmatpush1.msra.mxu0 0.0
        %531 = vmatprep.subr.mxu0 0.0
        %532 = vmatpush1.msra.mxu0 0.0
        %533 = vmatprep.subr.mxu0 0.0
        %534 = vmatpush1.msra.mxu0 0.0
        %535 = vmatprep.subr.mxu0 0.0
        %536 = vmatpush1.msra.mxu0 0.0
        %537 = vmatprep.subr.mxu0 0.0
        %538 = vmatpush1.msra.mxu0 0.0
        %539 = vmatprep.subr.mxu0 0.0
        %540 = vmatpush1.msra.mxu0 0.0
        %541 = vmatprep.subr.mxu0 0.0
        %542 = vmatpush1.msra.mxu0 0.0
        %543 = vmatprep.subr.mxu0 0.0
        %544 = vmatpush1.msra.mxu0 0.0
        %545 = vmatprep.subr.mxu0 0.0
        %546 = vmatpush1.msra.mxu0 0.0
        %547 = vmatprep.subr.mxu0 0.0
        %548 = vmatpush1.msra.mxu0 0.0
        %549 = vmatprep.subr.mxu0 0.0
        %550 = vmatpush1.msra.mxu0 0.0
        %551 = vmatprep.subr.mxu0 0.0
        %552 = vmatpush1.msra.mxu0 0.0
        %553 = vmatprep.subr.mxu0 0.0
        %554 = vmatpush1.msra.mxu0 0.0
        %555 = vmatprep.subr.mxu0 0.0
        %556 = vmatpush1.msra.mxu0 0.0
        %557 = vmatprep.subr.mxu0 0.0
        %558 = vmatpush1.msra.mxu0 0.0
        %559 = vmatprep.subr.mxu0 0.0
        %560 = vmatpush1.msra.mxu0 0.0
        %561 = vmatprep.subr.mxu0 0.0
        %562 = vmatpush1.msra.mxu0 0.0
        %563 = vmatprep.subr.mxu0 0.0
        %564 = vmatpush1.msra.mxu0 0.0
        %565 = vmatprep.subr.mxu0 0.0
        %566 = vmatpush1.msra.mxu0 0.0
        %567 = vmatprep.subr.mxu0 0.0
        %568 = vmatpush1.msra.mxu0 0.0
        %569 = vmatprep.subr.mxu0 0.0
        %570 = vmatpush1.msra.mxu0 0.0
        %571 = vmatprep.subr.mxu0 0.0
        %572 = vmatpush1.msra.mxu0 0.0
        %573 = vmatprep.subr.mxu0 0.0
        %574 = vmatpush1.msra.mxu0 0.0
        %575 = vmatprep.subr.mxu0 0.0
        %576 = vmatpush1.msra.mxu0 0.0
        %577 = vmatprep.subr.mxu0 0.0
        %578 = vmatpush1.msra.mxu0 0.0
        %579 = vmatprep.subr.mxu0 0.0
        %580 = vmatpush1.msra.mxu0 0.0
        %581 = vmatprep.mubr.f32.mxu0 0.0
        %582 = vmatmul.mubr.f32.gmra.mrb[0].mxu0 %v515
        %v583 = vpop.f32.mrb[0].mxu0
        %v584 = vadd.f32 0.0, %v583
        %v585 = vpop.f32.mrb[0].mxu0
        %586 = vdwg.mxu0
        %v587 = vld [vmem:[%s386] sm:$0xff]
        %v588 = vld [vmem:[%s386 + $0x8] sm:$0xff]
        %589 = vmatprep.subr.mxu0 0.0
        %590 = vmatpush1.msra.mxu0 %v587
        %591 = vmatprep.subr.mxu0 0.0
        %592 = vmatpush1.msra.mxu0 %v588
        %593 = vmatprep.subr.mxu0 0.0
        %594 = vmatpush1.msra.mxu0 0.0
        %595 = vmatprep.subr.mxu0 0.0
        %596 = vmatpush1.msra.mxu0 0.0
        %597 = vmatprep.subr.mxu0 0.0
        %598 = vmatpush1.msra.mxu0 0.0
        %599 = vmatprep.subr.mxu0 0.0
        %600 = vmatpush1.msra.mxu0 0.0
        %601 = vmatprep.subr.mxu0 0.0
        %602 = vmatpush1.msra.mxu0 0.0
        %603 = vmatprep.subr.mxu0 0.0
        %604 = vmatpush1.msra.mxu0 0.0
        %605 = vmatprep.subr.mxu0 0.0
        %606 = vmatpush1.msra.mxu0 0.0
        %607 = vmatprep.subr.mxu0 0.0
        %608 = vmatpush1.msra.mxu0 0.0
        %609 = vmatprep.subr.mxu0 0.0
        %610 = vmatpush1.msra.mxu0 0.0
        %611 = vmatprep.subr.mxu0 0.0
        %612 = vmatpush1.msra.mxu0 0.0
        %613 = vmatprep.subr.mxu0 0.0
        %614 = vmatpush1.msra.mxu0 0.0
        %615 = vmatprep.subr.mxu0 0.0
        %616 = vmatpush1.msra.mxu0 0.0
        %617 = vmatprep.subr.mxu0 0.0
        %618 = vmatpush1.msra.mxu0 0.0
        %619 = vmatprep.subr.mxu0 0.0
        %620 = vmatpush1.msra.mxu0 0.0
        %621 = vmatprep.subr.mxu0 0.0
        %622 = vmatpush1.msra.mxu0 0.0
        %623 = vmatprep.subr.mxu0 0.0
        %624 = vmatpush1.msra.mxu0 0.0
        %625 = vmatprep.subr.mxu0 0.0
        %626 = vmatpush1.msra.mxu0 0.0
        %627 = vmatprep.subr.mxu0 0.0
        %628 = vmatpush1.msra.mxu0 0.0
        %629 = vmatprep.subr.mxu0 0.0
        %630 = vmatpush1.msra.mxu0 0.0
        %631 = vmatprep.subr.mxu0 0.0
        %632 = vmatpush1.msra.mxu0 0.0
        %633 = vmatprep.subr.mxu0 0.0
        %634 = vmatpush1.msra.mxu0 0.0
        %635 = vmatprep.subr.mxu0 0.0
        %636 = vmatpush1.msra.mxu0 0.0
        %637 = vmatprep.subr.mxu0 0.0
        %638 = vmatpush1.msra.mxu0 0.0
        %639 = vmatprep.subr.mxu0 0.0
        %640 = vmatpush1.msra.mxu0 0.0
        %641 = vmatprep.subr.mxu0 0.0
        %642 = vmatpush1.msra.mxu0 0.0
        %643 = vmatprep.subr.mxu0 0.0
        %644 = vmatpush1.msra.mxu0 0.0
        %645 = vmatprep.subr.mxu0 0.0
        %646 = vmatpush1.msra.mxu0 0.0
        %647 = vmatprep.subr.mxu0 0.0
        %648 = vmatpush1.msra.mxu0 0.0
        %649 = vmatprep.subr.mxu0 0.0
        %650 = vmatpush1.msra.mxu0 0.0
        %651 = vmatprep.subr.mxu0 0.0
        %652 = vmatpush1.msra.mxu0 0.0
        %653 = vmatprep.mubr.f32.mxu0 0.0
        %654 = vmatmul.mubr.f32.gmra.mrb[0].mxu0 %v515
        %v655 = vpop.f32.mrb[0].mxu0
        %v656 = vadd.f32 0.0, %v655
        %v657 = vpop.f32.mrb[0].mxu0
        %658 = vdwg.mxu0
        %v660 = vrot.slane %v656, 7
        %v662 = vsel %vm462, 0.0, %v660
        %v663 = vadd.f32 %v584, %v662
        %v664 = vadd.f32 %v660, 0.0
        %s665 = sadd.s32 %s271, 16
        %s666 = scalar_lea.vmem %s260, %s665 [#allocation8]
        %v667 = vld [vmem:[%s666] sm:$0xff]
        %v668 = vld [vmem:[%s666 + $0x8] sm:$0x1]
        %v669 = vadd.f32 %v667, %v663
        %v670 = vadd.f32 %v668, %v664
        %671 = vst.msk [vmem:[%s666] sm:$0xff] %vm471, %v669
        %672 = vst.msk [vmem:[%s666 + $0x8] sm:$0x1] %vm473, %v670
        %s673 = sand.u32 %s120, 1
        %s674 = scalar_lea.sflag [#allocation4], %s673
        %s675 = sand.u32 %s120, 1
        %s676 = smul.addr %s675, 32
        %s677 = scalar_lea.vmem [#allocation8], %s676
        // Predicated region
        $region49: #{tpu_custom_call.1} parent=31 // pred_check
          %p678 = pneg %p130
        $region50: #{tpu_custom_call.1} parent=31 // pred_check_branch
          %680 = sbr.rel (%p678) target = $region52
        $region51: #{tpu_custom_call.1} parent=31 // pred_region
          %s682 = ssub.s32 512, 512
          %683 = vsyncadd %s674, %s682
          %s684 = smul.addr %s27, 4
          %s685 = smul.addr %s684, 128
          %s686 = scalar_lea.hbm %s3, %s685
          %s687 = sshll.u32 %s677, 4
          %s688 = int_to_ptr.vmem [resolvable:$true] %s687
          %693 = dma.vmem_to_hbm [thread:$0]  %s688, 512, %s686, %s674, 128, 128, 8
        $region52: #{tpu_custom_call.1} parent=31 // pred_fallthru
          _
      $region32: #{tpu_custom_call.1} parent=5 // pred_fallthru
        _
      %p694 = scmp.le.s32.totalorder 2, %s18
      // Predicated region
      $region53: #{tpu_custom_call.1} parent=5 // pred_check
        %p695 = pneg %p694
      $region54: #{tpu_custom_call.1} parent=5 // pred_check_branch
        %697 = sbr.rel (%p695) target = $region56
      $region55: #{tpu_custom_call.1} parent=5 // pred_region
        %s698 = ssub.s32 %s18, 2
        // Predicated region
        $region57: #{tpu_custom_call.1} parent=55 // pred_check
          %p699 = pneg %p136
        $region58: #{tpu_custom_call.1} parent=55 // pred_check_branch
          %701 = sbr.rel (%p699) target = $region60
        $region59: #{tpu_custom_call.1} parent=55 // pred_region
          %s702 = sand.u32 %s121, 1
          %s703 = scalar_lea.sflag [#allocation4], %s702
          %s704 = sand.u32 %s121, 1
          %s705 = smul.addr %s704, 32
          %s706 = scalar_lea.vmem [#allocation8], %s705
          %707 = dma.done %s703, 512
        $region60: #{tpu_custom_call.1} parent=55 // pred_fallthru
          _
      $region56: #{tpu_custom_call.1} parent=5 // pred_fallthru
        _
    $region6: #{tpu_custom_call.1} parent=1 // loop_footer
      %s22 = sadd.s32 1, %s18
    $region7: #{tpu_custom_call.1} parent=1 // loop_footer_branch
      %17 = sbr.rel target = $region3
    $region8: #{tpu_custom_call.1} parent=1 // loop_exit
      _
    %708 = vsyncpa [#allocation3], 1
    %s709 = scalar_lea.sflag [#allocation3], 1
    %710 = vsyncpa %s709, 1
    %711 = vsyncpa [#allocation6], 1
    %s712 = scalar_lea.sflag [#allocation6], 1
    %713 = vsyncpa %s712, 1
    %714 = vsyncpa [#allocation4], 1
    %s715 = scalar_lea.sflag [#allocation4], 1
    %716 = vsyncpa %s715, 1

</llo_original>
